<compile_context>
chip_gen: v7x
topology: tpu7x:2x2x1
jax: 0.10.0
libtpu: 0.0.40
codegen_flags: <defaults>
</compile_context>

<pallas_src>
import functools

import jax
import jax.numpy as jnp
from jax import lax
from jax.experimental import pallas as pl
from jax.experimental.pallas import tpu as pltpu


def _seg_kernel(x_ref, w3t_ref, b3_ref, w1_ref, b1_ref, out_ref, *, W):
    """One batch element, NCHW with flattened spatial dims.

    x_ref:   (1, Cin, H*W)  f32
    w3t_ref: (Cmid, 9*Cin)  f32   3x3 conv weights, rows ordered (dy, dx, cin)
    b3_ref:  (Cmid, 1)      f32
    w1_ref:  (Cmid, 1)      f32   1x1 out_layer weight
    b1_ref:  (1, 1)         f32   (SMEM scalar)
    out_ref: (1, 1, H*W)    f32
    """
    cin = x_ref.shape[1]
    hw = x_ref.shape[2]
    x = x_ref[0]                                         # (Cin, H*W)

    # In-kernel zero padding for the 'same' 3x3 conv.  In the row-major
    # flattened spatial axis, the (dy, dx) tap is a flat shift by
    # s = (dy-1)*W + (dx-1).  A zero pad of W+1 lanes on each side absorbs
    # every H-out-of-bounds read; the two column masks below kill the
    # W-out-of-bounds (row-wrap) reads.
    pad = W + 1
    zpad = jnp.zeros((cin, pad), jnp.float32)
    xp = jnp.concatenate([zpad, x, zpad], axis=1)        # (Cin, H*W + 2W + 2)

    col = lax.broadcasted_iota(jnp.int32, (1, hw), 1) % W
    left_ok = col >= 1                                   # tap reads column w-1
    right_ok = col <= W - 2                              # tap reads column w+1

    taps = []
    for dy in range(3):
        for dx in range(3):
            s = (dy - 1) * W + (dx - 1)
            t = xp[:, pad + s:pad + s + hw]              # (Cin, H*W)
            if dx == 0:
                t = jnp.where(left_ok, t, 0.0)
            elif dx == 2:
                t = jnp.where(right_ok, t, 0.0)
            taps.append(t)
    patches = jnp.concatenate(taps, axis=0)              # (9*Cin, H*W)

    # Synthetic segmentation base: single K=9*Cin MXU matmul + bias + ReLU.
    feat = lax.dot_general(
        w3t_ref[...], patches, (((1,), (0,)), ((), ())),
        preferred_element_type=jnp.float32)              # (Cmid, H*W)
    feat = jnp.maximum(feat + b3_ref[...], 0.0)

    # out_layer = Conv2d(Cmid, 1, 1): per-pixel weighted channel sum.
    # Done on the VPU/XLU (broadcast-mul + sublane reduce); M=1 on the MXU
    # would be ~99% masked.
    y = jnp.sum(feat * w1_ref[...], axis=0, keepdims=True) + b1_ref[0, 0]

    out_ref[...] = y.reshape(1, 1, hw).astype(out_ref.dtype)
    # Note: the `out_conv_in is None` branch of SegmentationModel
    # (x[:, 0, ...].unsqueeze(1)) would simply be
    #   out_ref[...] = feat[0:1, :].reshape(1, 1, hw)


def segmentation_forward(x_nchw, w3, b3, w1, b1):
    """x_nchw: (N, Cin, H, W) f32  ->  (N, 1, H, W) f32."""
    N, Cin, H, W = x_nchw.shape
    Cmid = w3.shape[3]
    HW = H * W

    # Zero-copy flatten of the spatial dims (row-major contiguity preserved).
    x_flat = x_nchw.reshape(N, Cin, HW)

    # Trace-time weight repack: (3,3,Cin,Cmid) -> (Cmid, 9*Cin) with row order
    # (dy, dx, cin), matching the tap concatenation order in the kernel.
    w3t = jnp.transpose(w3, (3, 0, 1, 2)).reshape(Cmid, 9 * Cin)
    b3c = jnp.reshape(b3, (Cmid, 1))
    w1c = jnp.reshape(w1, (Cmid, 1))
    b1s = jnp.reshape(b1, (1, 1))

    flops = 2 * N * HW * Cmid * (9 * Cin + 1)
    bytes_accessed = 4 * (N * Cin * HW + N * HW + w3t.size + 2 * Cmid + 1)

    # Working set per grid step: double-buffered input/output tiles, the padded
    # flat image, im2col patches and the feature map, with generous headroom.
    # Capped well under v7x's 64 MiB physical VMEM.
    step_bytes = 4 * HW * (2 * Cin + 10 * Cin + 2 * Cmid + 4)
    vmem_limit = int(min(max(4 * step_bytes, 8 * 1024 * 1024), 48 * 1024 * 1024))

    out_flat = pl.pallas_call(
        functools.partial(_seg_kernel, W=W),
        out_shape=jax.ShapeDtypeStruct((N, 1, HW), jnp.float32),
        grid=(N,),
        in_specs=[
            pl.BlockSpec((1, Cin, HW), lambda n: (n, 0, 0)),
            pl.BlockSpec((Cmid, 9 * Cin), lambda n: (0, 0)),
            pl.BlockSpec((Cmid, 1), lambda n: (0, 0)),
            pl.BlockSpec((Cmid, 1), lambda n: (0, 0)),
            pl.BlockSpec(memory_space=pltpu.MemorySpace.SMEM),   # b1 scalar
        ],
        out_specs=pl.BlockSpec((1, 1, HW), lambda n: (n, 0, 0)),
        compiler_params=pltpu.CompilerParams(
            dimension_semantics=("parallel",),
            vmem_limit_bytes=vmem_limit),
        cost_estimate=pl.CostEstimate(
            flops=flops, transcendentals=0, bytes_accessed=bytes_accessed),
    )(x_flat, w3t, b3c, w1c, b1s)

    # Zero-copy un-flatten back to NCHW.
    return out_flat.reshape(N, 1, H, W)


def _reference_forward(x_nchw, w3, b3, w1, b1):
    """Pure-JAX reference (lax conv), NCHW like PyTorch."""
    w3_oihw = jnp.transpose(w3, (3, 2, 0, 1))                    # (Cmid,Cin,3,3)
    out = lax.conv_general_dilated(
        x_nchw, w3_oihw, window_strides=(1, 1), padding=((1, 1), (1, 1)),
        dimension_numbers=("NCHW", "OIHW", "NCHW"))
    out = jnp.maximum(out + b3.reshape(1, -1, 1, 1), 0.0)
    w1_oihw = jnp.transpose(w1, (1, 0)).reshape(1, -1, 1, 1)     # (1,Cmid,1,1)
    y = lax.conv_general_dilated(
        out, w1_oihw, window_strides=(1, 1), padding=((0, 0), (0, 0)),
        dimension_numbers=("NCHW", "OIHW", "NCHW"))
    return y + b1.reshape(1, 1, 1, 1)


if __name__ == "__main__":
    N, Cin, H, W = 2, 4, 16, 16
    Cmid = 8                                  # == out_conv_in

    key = jax.random.PRNGKey(0)
    kx, kw3, kb3, kw1, kb1 = jax.random.split(key, 5)

    x = jax.random.normal(kx, (N, Cin, H, W), dtype=jnp.float32)
    w3 = jax.random.normal(kw3, (3, 3, Cin, Cmid), dtype=jnp.float32) * 0.1
    b3 = jax.random.normal(kb3, (1, Cmid), dtype=jnp.float32) * 0.1
    w1 = jax.random.normal(kw1, (Cmid, 1), dtype=jnp.float32) * 0.1
    b1 = jax.random.normal(kb1, (1, 1), dtype=jnp.float32) * 0.1

    y = segmentation_forward(x, w3, b3, w1, b1)
    jax.block_until_ready(y)

    y_ref = _reference_forward(x, w3, b3, w1, b1)
    assert y.shape == (N, 1, H, W), y.shape
    assert jnp.allclose(y, y_ref, atol=5e-4, rtol=5e-4), (
        float(jnp.max(jnp.abs(y - y_ref))))

    print("KERNEL_OK")
</pallas_src>

<mosaic_0001>
module attributes {stable_mosaic.version = 11 : i64} {
  func.func @_seg_kernel(%arg0: i32, %arg1: memref<1x4x256xf32, #tpu.memory_space<vmem>>, %arg2: memref<8x36xf32, #tpu.memory_space<vmem>>, %arg3: memref<8x1xf32, #tpu.memory_space<vmem>>, %arg4: memref<8x1xf32, #tpu.memory_space<vmem>>, %arg5: memref<1x1xf32, #tpu.memory_space<smem>>, %arg6: memref<1x1x256xf32, #tpu.memory_space<vmem>>) attributes {dimension_semantics = [#tpu.dimension_semantics<parallel>], iteration_bounds = array<i64: 2>, scalar_prefetch = 0 : i64, scratch_operands = 0 : i64, tpu.core_type = #tpu.core_type<tc>, window_params = [{transform_indices = @transform_0, window_bounds = array<i64: 1, 4, 256>}, {pipeline_mode = #tpu.pipeline_mode<synchronous>, transform_indices = @transform_1, window_bounds = array<i64: 8, 36>}, {pipeline_mode = #tpu.pipeline_mode<synchronous>, transform_indices = @transform_2, window_bounds = array<i64: 8, 1>}, {pipeline_mode = #tpu.pipeline_mode<synchronous>, transform_indices = @transform_3, window_bounds = array<i64: 8, 1>}, {transform_indices = @transform_4, window_bounds = array<i64: 1, 1>}, {transform_indices = @transform_5, window_bounds = array<i64: 1, 1, 256>}]} {
    %c0 = arith.constant 0 : index
    %c0_0 = arith.constant 0 : index
    %c0_1 = arith.constant 0 : index
    %0 = vector.load %arg1[%c0, %c0_0, %c0_1] : memref<1x4x256xf32, #tpu.memory_space<vmem>>, vector<1x4x256xf32>
    %1 = vector.shape_cast %0 : vector<1x4x256xf32> to vector<4x256xf32>
    %cst = arith.constant 0.000000e+00 : f32
    %2 = vector.broadcast %cst : f32 to vector<4x17xf32>
    %3 = tpu.concatenate %2, %1, %2 in 1 : vector<4x17xf32>, vector<4x256xf32>, vector<4x17xf32> -> vector<4x290xf32>
    %4 = tpu.iota {dimensions = array<i32: 1>} : vector<1x256xi32>
    %c16_i32 = arith.constant 16 : i32
    %c0_i32 = arith.constant 0 : i32
    %5 = arith.cmpi eq, %c16_i32, %c0_i32 : i32
    %c1_i32 = arith.constant 1 : i32
    %6 = arith.select %5, %c1_i32, %c16_i32 : i32
    %7 = vector.broadcast %6 : i32 to vector<1x256xi32>
    %8 = arith.remsi %4, %7 : vector<1x256xi32>
    %c0_i32_2 = arith.constant 0 : i32
    %9 = vector.broadcast %c0_i32_2 : i32 to vector<1x256xi32>
    %10 = arith.cmpi ne, %8, %9 : vector<1x256xi32>
    %c0_i32_3 = arith.constant 0 : i32
    %11 = vector.broadcast %c0_i32_3 : i32 to vector<1x256xi32>
    %12 = arith.cmpi slt, %8, %11 : vector<1x256xi32>
    %c0_i32_4 = arith.constant 0 : i32
    %13 = arith.cmpi slt, %6, %c0_i32_4 : i32
    %14 = vector.broadcast %13 : i1 to vector<1x256xi1>
    %15 = vector.broadcast %14 : vector<1x256xi1> to vector<1x256xi1>
    %16 = arith.xori %12, %15 : vector<1x256xi1>
    %17 = arith.andi %16, %10 : vector<1x256xi1>
    %18 = vector.broadcast %6 : i32 to vector<1x256xi32>
    %19 = arith.addi %8, %18 : vector<1x256xi32>
    %20 = arith.select %17, %19, %8 : vector<1x256xi1>, vector<1x256xi32>
    %c1_i32_5 = arith.constant 1 : i32
    %21 = vector.broadcast %c1_i32_5 : i32 to vector<1x256xi32>
    %22 = arith.cmpi sge, %20, %21 : vector<1x256xi32>
    %c14_i32 = arith.constant 14 : i32
    %23 = vector.broadcast %c14_i32 : i32 to vector<1x256xi32>
    %24 = arith.cmpi sle, %20, %23 : vector<1x256xi32>
    %25 = vector.extract_strided_slice %3 {offsets = [0, 0], sizes = [4, 256], strides = [1, 1]} : vector<4x290xf32> to vector<4x256xf32>
    %cst_6 = arith.constant 0.000000e+00 : f32
    %26 = vector.shape_cast %22 : vector<1x256xi1> to vector<1x256xi1>
    %27 = vector.broadcast %26 : vector<1x256xi1> to vector<4x256xi1>
    %28 = vector.broadcast %cst_6 : f32 to vector<4x256xf32>
    %29 = arith.select %27, %25, %28 : vector<4x256xi1>, vector<4x256xf32>
    %30 = vector.extract_strided_slice %3 {offsets = [0, 1], sizes = [4, 256], strides = [1, 1]} : vector<4x290xf32> to vector<4x256xf32>
    %31 = vector.extract_strided_slice %3 {offsets = [0, 2], sizes = [4, 256], strides = [1, 1]} : vector<4x290xf32> to vector<4x256xf32>
    %cst_7 = arith.constant 0.000000e+00 : f32
    %32 = vector.shape_cast %24 : vector<1x256xi1> to vector<1x256xi1>
    %33 = vector.broadcast %32 : vector<1x256xi1> to vector<4x256xi1>
    %34 = vector.broadcast %cst_7 : f32 to vector<4x256xf32>
    %35 = arith.select %33, %31, %34 : vector<4x256xi1>, vector<4x256xf32>
    %36 = vector.extract_strided_slice %3 {offsets = [0, 16], sizes = [4, 256], strides = [1, 1]} : vector<4x290xf32> to vector<4x256xf32>
    %cst_8 = arith.constant 0.000000e+00 : f32
    %37 = vector.shape_cast %22 : vector<1x256xi1> to vector<1x256xi1>
    %38 = vector.broadcast %37 : vector<1x256xi1> to vector<4x256xi1>
    %39 = vector.broadcast %cst_8 : f32 to vector<4x256xf32>
    %40 = arith.select %38, %36, %39 : vector<4x256xi1>, vector<4x256xf32>
    %41 = vector.extract_strided_slice %3 {offsets = [0, 17], sizes = [4, 256], strides = [1, 1]} : vector<4x290xf32> to vector<4x256xf32>
    %42 = vector.extract_strided_slice %3 {offsets = [0, 18], sizes = [4, 256], strides = [1, 1]} : vector<4x290xf32> to vector<4x256xf32>
    %cst_9 = arith.constant 0.000000e+00 : f32
    %43 = vector.shape_cast %24 : vector<1x256xi1> to vector<1x256xi1>
    %44 = vector.broadcast %43 : vector<1x256xi1> to vector<4x256xi1>
    %45 = vector.broadcast %cst_9 : f32 to vector<4x256xf32>
    %46 = arith.select %44, %42, %45 : vector<4x256xi1>, vector<4x256xf32>
    %47 = vector.extract_strided_slice %3 {offsets = [0, 32], sizes = [4, 256], strides = [1, 1]} : vector<4x290xf32> to vector<4x256xf32>
    %cst_10 = arith.constant 0.000000e+00 : f32
    %48 = vector.shape_cast %22 : vector<1x256xi1> to vector<1x256xi1>
    %49 = vector.broadcast %48 : vector<1x256xi1> to vector<4x256xi1>
    %50 = vector.broadcast %cst_10 : f32 to vector<4x256xf32>
    %51 = arith.select %49, %47, %50 : vector<4x256xi1>, vector<4x256xf32>
    %52 = vector.extract_strided_slice %3 {offsets = [0, 33], sizes = [4, 256], strides = [1, 1]} : vector<4x290xf32> to vector<4x256xf32>
    %53 = vector.extract_strided_slice %3 {offsets = [0, 34], sizes = [4, 256], strides = [1, 1]} : vector<4x290xf32> to vector<4x256xf32>
    %cst_11 = arith.constant 0.000000e+00 : f32
    %54 = vector.shape_cast %24 : vector<1x256xi1> to vector<1x256xi1>
    %55 = vector.broadcast %54 : vector<1x256xi1> to vector<4x256xi1>
    %56 = vector.broadcast %cst_11 : f32 to vector<4x256xf32>
    %57 = arith.select %55, %53, %56 : vector<4x256xi1>, vector<4x256xf32>
    %58 = tpu.concatenate %29, %30, %35, %40, %41, %46, %51, %52, %57 in 0 : vector<4x256xf32>, vector<4x256xf32>, vector<4x256xf32>, vector<4x256xf32>, vector<4x256xf32>, vector<4x256xf32>, vector<4x256xf32>, vector<4x256xf32>, vector<4x256xf32> -> vector<36x256xf32>
    %c0_12 = arith.constant 0 : index
    %c0_13 = arith.constant 0 : index
    %59 = vector.load %arg2[%c0_12, %c0_13] : memref<8x36xf32, #tpu.memory_space<vmem>>, vector<8x36xf32>
    %cst_14 = arith.constant dense<0.000000e+00> : vector<8x256xf32>
    %60 = tpu.matmul %59, %58, %cst_14 {dimension_numbers = #tpu.dot_dimension_numbers<[1], [0], [0], [1], [0, 0, 1, 1], [], []>} : vector<8x36xf32>, vector<36x256xf32>, vector<8x256xf32> -> vector<8x256xf32>
    %c0_15 = arith.constant 0 : index
    %c0_16 = arith.constant 0 : index
    %61 = vector.load %arg3[%c0_15, %c0_16] : memref<8x1xf32, #tpu.memory_space<vmem>>, vector<8x1xf32>
    %62 = vector.broadcast %61 : vector<8x1xf32> to vector<8x256xf32>
    %63 = arith.addf %60, %62 : vector<8x256xf32>
    %cst_17 = arith.constant 0.000000e+00 : f32
    %64 = vector.broadcast %cst_17 : f32 to vector<8x256xf32>
    %65 = arith.maximumf %63, %64 : vector<8x256xf32>
    %c0_18 = arith.constant 0 : index
    %c0_19 = arith.constant 0 : index
    %66 = vector.load %arg4[%c0_18, %c0_19] : memref<8x1xf32, #tpu.memory_space<vmem>>, vector<8x1xf32>
    %67 = vector.broadcast %66 : vector<8x1xf32> to vector<8x256xf32>
    %68 = arith.mulf %65, %67 : vector<8x256xf32>
    %cst_20 = arith.constant dense<0.000000e+00> : vector<256xf32>
    %69 = vector.multi_reduction <add>, %68, %cst_20 [0] : vector<8x256xf32> to vector<256xf32>
    %70 = vector.shape_cast %69 : vector<256xf32> to vector<1x256xf32>
    %c0_21 = arith.constant 0 : index
    %c0_22 = arith.constant 0 : index
    %71 = memref.load %arg5[%c0_21, %c0_22] : memref<1x1xf32, #tpu.memory_space<smem>>
    %72 = vector.broadcast %71 : f32 to vector<1x256xf32>
    %73 = arith.addf %70, %72 : vector<1x256xf32>
    %74 = vector.shape_cast %73 : vector<1x256xf32> to vector<1x1x256xf32>
    %c0_23 = arith.constant 0 : index
    %c0_24 = arith.constant 0 : index
    %c0_25 = arith.constant 0 : index
    %75 = vector.load %arg6[%c0_23, %c0_24, %c0_25] : memref<1x1x256xf32, #tpu.memory_space<vmem>>, vector<1x1x256xf32>
    tpu.vector_store %arg6[%c0_23, %c0_24, %c0_25], %74 {strides = array<i32>} : memref<1x1x256xf32, #tpu.memory_space<vmem>>, vector<1x1x256xf32>,
    return
  }
  func.func @transform_0(%arg0: i32) -> (i32, i32, i32) {
    %c0_i32 = arith.constant 0 : i32
    %c0_i32_0 = arith.constant 0 : i32
    %c0_i32_1 = arith.constant 0 : i32
    return %arg0, %c0_i32, %c0_i32_0 : i32, i32, i32
  }
  func.func @transform_1(%arg0: i32) -> (i32, i32) {
    %c0_i32 = arith.constant 0 : i32
    %c0_i32_0 = arith.constant 0 : i32
    %c0_i32_1 = arith.constant 0 : i32
    return %c0_i32, %c0_i32_0 : i32, i32
  }
  func.func @transform_2(%arg0: i32) -> (i32, i32) {
    %c0_i32 = arith.constant 0 : i32
    %c0_i32_0 = arith.constant 0 : i32
    %c0_i32_1 = arith.constant 0 : i32
    return %c0_i32, %c0_i32_0 : i32, i32
  }
  func.func @transform_3(%arg0: i32) -> (i32, i32) {
    %c0_i32 = arith.constant 0 : i32
    %c0_i32_0 = arith.constant 0 : i32
    %c0_i32_1 = arith.constant 0 : i32
    return %c0_i32, %c0_i32_0 : i32, i32
  }
  func.func @transform_4(%arg0: i32) -> (i32, i32) {
    %c0_i32 = arith.constant 0 : i32
    %c0_i32_0 = arith.constant 0 : i32
    %c0_i32_1 = arith.constant 0 : i32
    return %c0_i32, %c0_i32_0 : i32, i32
  }
  func.func @transform_5(%arg0: i32) -> (i32, i32, i32) {
    %c0_i32 = arith.constant 0 : i32
    %c0_i32_0 = arith.constant 0 : i32
    %c0_i32_1 = arith.constant 0 : i32
    return %arg0, %c0_i32, %c0_i32_0 : i32, i32, i32
  }
}

</mosaic_0001>

<llo_original>
// kernel: tpu_custom_call.1
$region0: #{tpu_custom_call.1}
  #allocation0 [shape = 'u32[]', space=smem, size = 0x4, offset = 0x4, fixed_abs, tag = 'smem constant byte address 0x4 - core index']
  #allocation1 [shape = 'u32[144,128]{1,0:T(1,128)}', space=vmem, size = 0x12000, scoped, tag = 'internal scratch']
  #allocation2 [shape = 'f32[1,1]{1,0:T(1,128)S(6)}', space=smem, size = 0x200, scoped, tag = 'scoped memory for tpu_custom_call.1']
  %s0 = inlined_call_operand.vmem [shape: f32[2,4,256], index: 0, kind: input, shape index: {}]
  %s1 = inlined_call_operand.vmem [shape: f32[8,36], index: 1, kind: input, shape index: {}]
  %s2 = inlined_call_operand.vmem [shape: f32[8,1], index: 2, kind: input, shape index: {}]
  %s3 = inlined_call_operand.vmem [shape: f32[8,1], index: 3, kind: input, shape index: {}]
  %s4 = inlined_call_operand.<no memory space> [shape: f32[1,1], index: 4, kind: input, shape index: {}]
  %s5 = inlined_call_operand.hbm [shape: f32[2,1,256], index: 5, kind: output, shape index: {}]
  %s6 = sld [smem:[#allocation0]]
  $region53: #{tpu_custom_call.1} parent=0
    _
  %s8 = ssub.s32 1, %s6
  %s9 = scalar_select 0, %s8, %s6
  %10 = sst [smem:[#allocation2]] %s4
  $region1: #{tpu_custom_call.1} parent=0
    #allocation3 [shape = 'u8[2048]{0}', space=vmem, size = 0x800, scoped, tag = 'output window, operand 0']
    #allocation4 [shape = 's32[2]{0}', space=sflag, size = 0x8, scoped, tag = 'scoped memory for tpu_custom_call.1']
    %11 = vsyncpa [#allocation4], 0
    %s12 = scalar_lea.sflag [#allocation4], 1
    %13 = vsyncpa %s12, 0
    loop: start=0, step=1, limit=4
    $region2: #{tpu_custom_call.1} parent=1 // loop_pre_header
      _
    $region3: #{tpu_custom_call.1} parent=1 // loop_header
      %s15 = sphi 0, %s19
      %p16 = scmp.ge.s32.totalorder %s15, 4
      %s25 = sphi 0, %s27
      %s28 = sphi 0, %s25
      %s29 = sphi 0, %s28
      %s45 = sphi 0, %s29
      %s49 = sphi 0, %s49
      %s51 = sphi 0, %s49
      %s52 = sphi 0, %s51
      %s66 = sphi 0, %s52
      %s70 = sphi 0, %s70
      %s72 = sphi 0, %s70
      %s73 = sphi 0, %s72
      %s87 = sphi 0, %s73
      %s91 = sphi 0, %s91
      %s93 = sphi 0, %s91
      %s94 = sphi 0, %s93
      %s108 = sphi 0, %s94
      %s112 = sphi 0, %s112
      %s114 = sphi 0, %s112
      %s115 = sphi 0, %s114
      %s129 = sphi 0, %s115
      %s135 = sphi 0, %s137
      %s138 = sphi 0, %s135
      %s139 = sphi 0, %s138
      %s155 = sphi 0, %s139
    $region4: #{tpu_custom_call.1} parent=1 // loop_header_branch
      %18 = sbr.rel (%p16) target = $region8
    $region5: #{tpu_custom_call.1} parent=1 // loop_body
      %s20 = ssub.s32 %s15, 1
      %s21 = ssub.s32 %s15, 2
      %s22 = sadd.s32 %s15, 1
      %s23 = ssub.s32 %s15, %s22
      %p24 = scmp.eq.s32.totalorder %s23, 0
      %s26 = sadd.s32 %s25, 1
      %s27 = scalar_select %p24, %s25, %s26
      %p30 = pneg %p24
      %p31 = scmp.eq.s32.totalorder %s15, 1
      %p32 = por %p30, %p31
      %p33 = scmp.ne.s32.totalorder %s25, %s28
      %p34 = scmp.eq.s32.totalorder %s15, 0
      %p35 = por %p33, %p34
      %p36 = scmp.ne.s32.totalorder %s25, %s28
      %p37 = scmp.eq.s32.totalorder %s20, 1
      %p38 = por %p36, %p37
      %p39 = scmp.ne.s32.totalorder %s28, %s29
      %p40 = scmp.eq.s32.totalorder %s20, 0
      %p41 = por %p39, %p40
      %p42 = scmp.ne.s32.totalorder %s28, %s29
      %p43 = scmp.eq.s32.totalorder %s21, 1
      %p44 = por %p42, %p43
      %p46 = scmp.ne.s32.totalorder %s29, %s45
      %p47 = scmp.eq.s32.totalorder %s21, 0
      %p48 = por %p46, %p47
      %s50 = sadd.s32 %s49, 1
      %p53 = scmp.eq.s32.totalorder %s15, 1
      %p54 = scmp.ne.s32.totalorder %s49, %s51
      %p55 = scmp.eq.s32.totalorder %s15, 0
      %p56 = por %p54, %p55
      %p57 = scmp.ne.s32.totalorder %s49, %s51
      %p58 = scmp.eq.s32.totalorder %s20, 1
      %p59 = por %p57, %p58
      %p60 = scmp.ne.s32.totalorder %s51, %s52
      %p61 = scmp.eq.s32.totalorder %s20, 0
      %p62 = por %p60, %p61
      %p63 = scmp.ne.s32.totalorder %s51, %s52
      %p64 = scmp.eq.s32.totalorder %s21, 1
      %p65 = por %p63, %p64
      %p67 = scmp.ne.s32.totalorder %s52, %s66
      %p68 = scmp.eq.s32.totalorder %s21, 0
      %p69 = por %p67, %p68
      %s71 = sadd.s32 %s70, 1
      %p74 = scmp.eq.s32.totalorder %s15, 1
      %p75 = scmp.ne.s32.totalorder %s70, %s72
      %p76 = scmp.eq.s32.totalorder %s15, 0
      %p77 = por %p75, %p76
      %p78 = scmp.ne.s32.totalorder %s70, %s72
      %p79 = scmp.eq.s32.totalorder %s20, 1
      %p80 = por %p78, %p79
      %p81 = scmp.ne.s32.totalorder %s72, %s73
      %p82 = scmp.eq.s32.totalorder %s20, 0
      %p83 = por %p81, %p82
      %p84 = scmp.ne.s32.totalorder %s72, %s73
      %p85 = scmp.eq.s32.totalorder %s21, 1
      %p86 = por %p84, %p85
      %p88 = scmp.ne.s32.totalorder %s73, %s87
      %p89 = scmp.eq.s32.totalorder %s21, 0
      %p90 = por %p88, %p89
      %s92 = sadd.s32 %s91, 1
      %p95 = scmp.eq.s32.totalorder %s15, 1
      %p96 = scmp.ne.s32.totalorder %s91, %s93
      %p97 = scmp.eq.s32.totalorder %s15, 0
      %p98 = por %p96, %p97
      %p99 = scmp.ne.s32.totalorder %s91, %s93
      %p100 = scmp.eq.s32.totalorder %s20, 1
      %p101 = por %p99, %p100
      %p102 = scmp.ne.s32.totalorder %s93, %s94
      %p103 = scmp.eq.s32.totalorder %s20, 0
      %p104 = por %p102, %p103
      %p105 = scmp.ne.s32.totalorder %s93, %s94
      %p106 = scmp.eq.s32.totalorder %s21, 1
      %p107 = por %p105, %p106
      %p109 = scmp.ne.s32.totalorder %s94, %s108
      %p110 = scmp.eq.s32.totalorder %s21, 0
      %p111 = por %p109, %p110
      %s113 = sadd.s32 %s112, 1
      %p116 = scmp.eq.s32.totalorder %s15, 1
      %p117 = scmp.ne.s32.totalorder %s112, %s114
      %p118 = scmp.eq.s32.totalorder %s15, 0
      %p119 = por %p117, %p118
      %p120 = scmp.ne.s32.totalorder %s112, %s114
      %p121 = scmp.eq.s32.totalorder %s20, 1
      %p122 = por %p120, %p121
      %p123 = scmp.ne.s32.totalorder %s114, %s115
      %p124 = scmp.eq.s32.totalorder %s20, 0
      %p125 = por %p123, %p124
      %p126 = scmp.ne.s32.totalorder %s114, %s115
      %p127 = scmp.eq.s32.totalorder %s21, 1
      %p128 = por %p126, %p127
      %p130 = scmp.ne.s32.totalorder %s115, %s129
      %p131 = scmp.eq.s32.totalorder %s21, 0
      %p132 = por %p130, %p131
      %s133 = ssub.s32 %s15, %s22
      %p134 = scmp.eq.s32.totalorder %s133, 0
      %s136 = sadd.s32 %s135, 1
      %s137 = scalar_select %p134, %s135, %s136
      %p140 = pneg %p134
      %p141 = scmp.eq.s32.totalorder %s15, 1
      %p142 = por %p140, %p141
      %p143 = scmp.ne.s32.totalorder %s135, %s138
      %p144 = scmp.eq.s32.totalorder %s15, 0
      %p145 = por %p143, %p144
      %p146 = scmp.ne.s32.totalorder %s135, %s138
      %p147 = scmp.eq.s32.totalorder %s20, 1
      %p148 = por %p146, %p147
      %p149 = scmp.ne.s32.totalorder %s138, %s139
      %p150 = scmp.eq.s32.totalorder %s20, 0
      %p151 = por %p149, %p150
      %p152 = scmp.ne.s32.totalorder %s138, %s139
      %p153 = scmp.eq.s32.totalorder %s21, 1
      %p154 = por %p152, %p153
      %p156 = scmp.ne.s32.totalorder %s139, %s155
      %p157 = scmp.eq.s32.totalorder %s21, 0
      %p158 = por %p156, %p157
      %p159 = scmp.le.s32.totalorder 1, %s15
      %p160 = scmp.lt.s32.totalorder %s15, 3
      %p161 = pnand %p159, %p160
      %p162 = pneg %p161
      // Predicated region
      $region9: #{tpu_custom_call.1} parent=5 // pred_check
        _
      $region10: #{tpu_custom_call.1} parent=5 // pred_check_branch
        %164 = sbr.rel (%p161) target = $region12
      $region11: #{tpu_custom_call.1} parent=5 // pred_region
        %s165 = ssub.s32 %s15, 1
        // Predicated region
        $region13: #{tpu_custom_call.1} parent=11 // pred_check
          %p166 = pneg %p62
        $region14: #{tpu_custom_call.1} parent=11 // pred_check_branch
          %168 = sbr.rel (%p166) target = $region16
        $region15: #{tpu_custom_call.1} parent=11 // pred_region
          _
        $region16: #{tpu_custom_call.1} parent=11 // pred_fallthru
          _
        // Predicated region
        $region17: #{tpu_custom_call.1} parent=11 // pred_check
          %p169 = pneg %p83
        $region18: #{tpu_custom_call.1} parent=11 // pred_check_branch
          %171 = sbr.rel (%p169) target = $region20
        $region19: #{tpu_custom_call.1} parent=11 // pred_region
          _
        $region20: #{tpu_custom_call.1} parent=11 // pred_fallthru
          _
        // Predicated region
        $region21: #{tpu_custom_call.1} parent=11 // pred_check
          %p172 = pneg %p104
        $region22: #{tpu_custom_call.1} parent=11 // pred_check_branch
          %174 = sbr.rel (%p172) target = $region24
        $region23: #{tpu_custom_call.1} parent=11 // pred_region
          _
        $region24: #{tpu_custom_call.1} parent=11 // pred_fallthru
          _
        // Predicated region
        $region25: #{tpu_custom_call.1} parent=11 // pred_check
          %p175 = pneg %p125
        $region26: #{tpu_custom_call.1} parent=11 // pred_check_branch
          %177 = sbr.rel (%p175) target = $region28
        $region27: #{tpu_custom_call.1} parent=11 // pred_region
          _
        $region28: #{tpu_custom_call.1} parent=11 // pred_fallthru
          _
      $region12: #{tpu_custom_call.1} parent=5 // pred_fallthru
        _
      %p178 = scmp.lt.s32.totalorder %s15, 2
      // Predicated region
      $region29: #{tpu_custom_call.1} parent=5 // pred_check
        %p179 = pneg %p178
      $region30: #{tpu_custom_call.1} parent=5 // pred_check_branch
        %181 = sbr.rel (%p179) target = $region32
      $region31: #{tpu_custom_call.1} parent=5 // pred_region
        // Predicated region
        $region33: #{tpu_custom_call.1} parent=31 // pred_check
          %p182 = pneg %p35
        $region34: #{tpu_custom_call.1} parent=31 // pred_check_branch
          %184 = sbr.rel (%p182) target = $region36
        $region35: #{tpu_custom_call.1} parent=31 // pred_region
          %p185 = scmp.lt.s32.totalorder %s15, 1
          %s186 = scalar_select %p185, %s15, 1
          %s187 = smul.addr %s186, 2
          %s188 = smul.addr %s187, 4
          %s189 = scalar_lea.vmem %s0, %s188
        $region36: #{tpu_custom_call.1} parent=31 // pred_fallthru
          _
      $region32: #{tpu_custom_call.1} parent=5 // pred_fallthru
        _
      %p190 = scmp.le.s32.totalorder 1, %s15
      %p191 = scmp.lt.s32.totalorder %s15, 3
      %p192 = pnand %p190, %p191
      %p193 = pneg %p192
      // Predicated region
      $region37: #{tpu_custom_call.1} parent=5 // pred_check
        _
      $region38: #{tpu_custom_call.1} parent=5 // pred_check_branch
        %195 = sbr.rel (%p192) target = $region40
      $region39: #{tpu_custom_call.1} parent=5 // pred_region
        %s196 = ssub.s32 %s15, 1
        %p197 = scmp.lt.s32.totalorder %s20, 1
        %s198 = scalar_select %p197, %s20, 1
        %s199 = smul.addr %s198, 2
        %s200 = smul.addr %s199, 4
        %s201 = scalar_lea.vmem %s0, %s200
        %p202 = pneg %p41
        %p203 = pneg %p38
        %p204 = pneg %p62
        %p205 = pneg %p59
        %p206 = pneg %p83
        %p207 = pneg %p80
        %p208 = pneg %p104
        %p209 = pneg %p101
        %p210 = pneg %p125
        %p211 = pneg %p122
        %p212 = pneg %p151
        %p213 = pneg %p148
        %s214 = sand.u32 %s138, 1
        %s215 = scalar_lea.sflag [#allocation4], %s214
        %s216 = sand.u32 %s138, 1
        %s217 = smul.addr %s216, 2
        %s218 = scalar_lea.vmem [#allocation3], %s217
        %p219 = scmp.lt.s32.totalorder %s20, 1
        %s220 = scalar_select %p219, %s20, 1
        %s221 = smul.addr %s220, 2
        %s222 = smul.addr %s221, 4
        %s223 = scalar_lea.vmem %s0, %s222
        %v224 = vld [vmem:[%s223] sm:$0xff]
        %v226 = vcombine.high %v224, %v224
        %227 = vrot.lane.b32.xlu0 %v224, 17
        %v228 = vpop.permute.xlu0 %227
        %229 = vrot.lane.b32.xlu0 %v226, 17
        %v230 = vpop.permute.xlu0 %229
        %vm231 = vcmask 138240
        %v232 = vsel %vm231, %v228, %v230
        %v236 = vsel %vm231, 0.0, %v228
        %v237 = vsel %vm231, %v230, 0.0
        %v238 = vlaneseq
        %v239 = vand.u32 %v238, 127
        %v240 = vadd.s32 %v239, 128
        %vm241 = vcmp.lt.s32.totalorder %v239, 0
        %v242 = vsub.s32 0, %v239
        %v243 = vsel %vm241, %v242, %v239
        %v244 = vshrl.u32 %v243, 4
        %v245 = vand.u32 %v243, 15
        %v246 = vsub.s32 0, %v245
        %v247 = vsel %vm241, %v246, %v245
        %vm248 = vcmp.lt.s32.totalorder %v240, 0
        %v249 = vsub.s32 0, %v240
        %v250 = vsel %vm248, %v249, %v240
        %v251 = vshrl.u32 %v250, 4
        %v252 = vand.u32 %v250, 15
        %v253 = vsub.s32 0, %v252
        %v254 = vsel %vm248, %v253, %v252
        %vm255 = vcmp.ne.s32.totalorder %v247, 0
        %vm256 = vcmp.ne.s32.totalorder %v254, 0
        %vm257 = vcmp.lt.s32.totalorder %v247, 0
        %vm258 = vcmp.lt.s32.totalorder %v254, 0
        %vm259 = vmand %vm257, %vm255
        %vm260 = vmand %vm258, %vm256
        %v261 = vadd.s32 %v247, 16
        %v262 = vadd.s32 %v254, 16
        %v263 = vsel %vm259, %v261, %v247
        %v264 = vsel %vm260, %v262, %v254
        %vm265 = vcmp.ge.s32.totalorder %v263, 1
        %vm266 = vcmp.ge.s32.totalorder %v264, 1
        %vm267 = vcmp.le.s32.totalorder %v263, 14
        %vm268 = vcmp.le.s32.totalorder %v264, 14
        %v269 = vsel %vm265, 1, 0
        %v270 = vsel %vm266, 1, 0
        %vm271 = vcmp.eq.s32.totalorder %v269, 1
        %vm272 = vcmp.eq.s32.totalorder %v270, 1
        %v273 = vsel %vm271, %v236, 0.0
        %v274 = vsel %vm272, %v232, 0.0
        %v275 = vsel %vm267, 1, 0
        %v276 = vsel %vm268, 1, 0
        %vm277 = vcmp.eq.s32.totalorder %v275, 1
        %vm278 = vcmp.eq.s32.totalorder %v276, 1
        %281 = vrot.lane.b32.xlu0 %v236, 126
        %v282 = vpop.permute.xlu0 %281
        %283 = vrot.lane.b32.xlu0 %v232, 126
        %v284 = vpop.permute.xlu0 %283
        %285 = vrot.lane.b32.xlu0 %v237, 126
        %v286 = vpop.permute.xlu0 %285
        %vm287 = vcmask 1031168
        %v288 = vsel %vm287, %v282, %v284
        %v289 = vsel %vm287, %v284, %v286
        %v292 = vsel %vm277, %v288, 0.0
        %v293 = vsel %vm278, %v289, 0.0
        %294 = vrot.lane.b32.xlu0 %v236, 112
        %v295 = vpop.permute.xlu0 %294
        %296 = vrot.lane.b32.xlu0 %v232, 112
        %v297 = vpop.permute.xlu0 %296
        %298 = vrot.lane.b32.xlu0 %v237, 112
        %v299 = vpop.permute.xlu0 %298
        %vm300 = vcmask 916480
        %v301 = vsel %vm300, %v295, %v297
        %v302 = vsel %vm300, %v297, %v299
        %v305 = vsel %vm271, %v301, 0.0
        %v306 = vsel %vm272, %v302, 0.0
        %307 = vrot.lane.b32.xlu0 %v236, 110
        %v308 = vpop.permute.xlu0 %307
        %309 = vrot.lane.b32.xlu0 %v232, 110
        %v310 = vpop.permute.xlu0 %309
        %311 = vrot.lane.b32.xlu0 %v237, 110
        %v312 = vpop.permute.xlu0 %311
        %vm313 = vcmask 900096
        %v314 = vsel %vm313, %v308, %v310
        %v315 = vsel %vm313, %v310, %v312
        %v318 = vsel %vm277, %v314, 0.0
        %v319 = vsel %vm278, %v315, 0.0
        %320 = vrot.lane.b32.xlu0 %v236, 96
        %v321 = vpop.permute.xlu0 %320
        %322 = vrot.lane.b32.xlu0 %v232, 96
        %v323 = vpop.permute.xlu0 %322
        %324 = vrot.lane.b32.xlu0 %v237, 96
        %v325 = vpop.permute.xlu0 %324
        %vm326 = vcmask 785408
        %v327 = vsel %vm326, %v321, %v323
        %v328 = vsel %vm326, %v323, %v325
        %v331 = vsel %vm271, %v327, 0.0
        %v332 = vsel %vm272, %v328, 0.0
        %333 = vrot.lane.b32.xlu0 %v236, 94
        %v334 = vpop.permute.xlu0 %333
        %335 = vrot.lane.b32.xlu0 %v232, 94
        %v336 = vpop.permute.xlu0 %335
        %337 = vrot.lane.b32.xlu0 %v237, 94
        %v338 = vpop.permute.xlu0 %337
        %vm339 = vcmask 769024
        %v340 = vsel %vm339, %v334, %v336
        %v341 = vsel %vm339, %v336, %v338
        %v344 = vsel %vm277, %v340, 0.0
        %v345 = vsel %vm278, %v341, 0.0
        %v346 = vrot.slane %v236, 4
        %v347 = vrot.slane %v232, 4
        %v348 = vrot.slane %v237, 4
        %349 = vrot.lane.b32.xlu0 %v346, 127
        %v350 = vpop.permute.xlu0 %349
        %351 = vrot.lane.b32.xlu0 %v347, 127
        %v352 = vpop.permute.xlu0 %351
        %353 = vrot.lane.b32.xlu0 %v348, 127
        %v354 = vpop.permute.xlu0 %353
        %vm355 = vcmask 1039360
        %v356 = vsel %vm355, %v350, %v352
        %v357 = vsel %vm355, %v352, %v354
        %v362 = vrot.slane %v305, 4
        %v363 = vrot.slane %v306, 4
        %366 = vrot.lane.b32.xlu0 %v236, 111
        %v367 = vpop.permute.xlu0 %366
        %368 = vrot.lane.b32.xlu0 %v232, 111
        %v369 = vpop.permute.xlu0 %368
        %370 = vrot.lane.b32.xlu0 %v237, 111
        %v371 = vpop.permute.xlu0 %370
        %vm372 = vcmask 908288
        %v373 = vsel %vm372, %v367, %v369
        %v374 = vsel %vm372, %v369, %v371
        %v379 = vrot.slane %v318, 4
        %v380 = vrot.slane %v319, 4
        %383 = vrot.lane.b32.xlu0 %v346, 95
        %v384 = vpop.permute.xlu0 %383
        %385 = vrot.lane.b32.xlu0 %v347, 95
        %v386 = vpop.permute.xlu0 %385
        %387 = vrot.lane.b32.xlu0 %v348, 95
        %v388 = vpop.permute.xlu0 %387
        %vm389 = vcmask 777216
        %v390 = vsel %vm389, %v384, %v386
        %v391 = vsel %vm389, %v386, %v388
        %vm394 = vcmask 1043456
        %v395 = vsel %vm394, %v273, %v356
        %v396 = vsel %vm394, %v274, %v357
        %v397 = vsel %vm394, %v292, %v362
        %v398 = vsel %vm394, %v293, %v363
        %v399 = vsel %vm394, %v373, %v379
        %v400 = vsel %vm394, %v374, %v380
        %v401 = vsel %vm394, %v331, %v390
        %v402 = vsel %vm394, %v332, %v391
        %v403 = vld [vmem:[%s1] sm:$0xff]
        %v404 = vld [vmem:[%s2] sm:$0xff]
        %406 = vset.pattern.permute.xlu0 0
        %407 = vperm.xlu0 %406, %v404
        %v408 = vpop.permute.xlu0 %407
        %vm410 = vcmask 293888
        %v412 = vsel %vm410, %v403, 0
        %v415 = vsel %vm394, %v344, 0
        %v418 = vsel %vm394, %v345, 0
        %420 = vmatprep.subr.mxu0 %v396
        %421 = vmatpush1.msra.mxu0 %v395
        %422 = vmatprep.subr.mxu0 %v398
        %423 = vmatpush1.msra.mxu0 %v397
        %424 = vmatprep.subr.mxu0 %v400
        %425 = vmatpush1.msra.mxu0 %v399
        %426 = vmatprep.subr.mxu0 %v402
        %427 = vmatpush1.msra.mxu0 %v401
        %428 = vmatprep.subr.mxu0 %v418
        %429 = vmatpush1.msra.mxu0 %v415
        %430 = vmatprep.subr.mxu0 0.0
        %431 = vmatpush1.msra.mxu0 0.0
        %432 = vmatprep.subr.mxu0 0.0
        %433 = vmatpush1.msra.mxu0 0.0
        %434 = vmatprep.subr.mxu0 0.0
        %435 = vmatpush1.msra.mxu0 0.0
        %436 = vmatprep.subr.mxu0 0.0
        %437 = vmatpush1.msra.mxu0 0.0
        %438 = vmatprep.subr.mxu0 0.0
        %439 = vmatpush1.msra.mxu0 0.0
        %440 = vmatprep.subr.mxu0 0.0
        %441 = vmatpush1.msra.mxu0 0.0
        %442 = vmatprep.subr.mxu0 0.0
        %443 = vmatpush1.msra.mxu0 0.0
        %444 = vmatprep.subr.mxu0 0.0
        %445 = vmatpush1.msra.mxu0 0.0
        %446 = vmatprep.subr.mxu0 0.0
        %447 = vmatpush1.msra.mxu0 0.0
        %448 = vmatprep.subr.mxu0 0.0
        %449 = vmatpush1.msra.mxu0 0.0
        %450 = vmatprep.subr.mxu0 0.0
        %451 = vmatpush1.msra.mxu0 0.0
        %452 = vmatprep.subr.mxu0 0.0
        %453 = vmatpush1.msra.mxu0 0.0
        %454 = vmatprep.subr.mxu0 0.0
        %455 = vmatpush1.msra.mxu0 0.0
        %456 = vmatprep.subr.mxu0 0.0
        %457 = vmatpush1.msra.mxu0 0.0
        %458 = vmatprep.subr.mxu0 0.0
        %459 = vmatpush1.msra.mxu0 0.0
        %460 = vmatprep.subr.mxu0 0.0
        %461 = vmatpush1.msra.mxu0 0.0
        %462 = vmatprep.subr.mxu0 0.0
        %463 = vmatpush1.msra.mxu0 0.0
        %464 = vmatprep.subr.mxu0 0.0
        %465 = vmatpush1.msra.mxu0 0.0
        %466 = vmatprep.subr.mxu0 0.0
        %467 = vmatpush1.msra.mxu0 0.0
        %468 = vmatprep.subr.mxu0 0.0
        %469 = vmatpush1.msra.mxu0 0.0
        %470 = vmatprep.subr.mxu0 0.0
        %471 = vmatpush1.msra.mxu0 0.0
        %472 = vmatprep.subr.mxu0 0.0
        %473 = vmatpush1.msra.mxu0 0.0
        %474 = vmatprep.subr.mxu0 0.0
        %475 = vmatpush1.msra.mxu0 0.0
        %476 = vmatprep.subr.mxu0 0.0
        %477 = vmatpush1.msra.mxu0 0.0
        %478 = vmatprep.subr.mxu0 0.0
        %479 = vmatpush1.msra.mxu0 0.0
        %480 = vmatprep.subr.mxu0 0.0
        %481 = vmatpush1.msra.mxu0 0.0
        %482 = vmatprep.subr.mxu0 0.0
        %483 = vmatpush1.msra.mxu0 0.0
        %484 = vmatprep.mubr.f32.mxu0 0.0
        %485 = vmatmul.mubr.f32.gmra.mrb[0].mxu0 %v412
        %v486 = vpop.f32.mrb[0].mxu0
        %v487 = vadd.f32 %v408, %v486
        %v488 = vpop.f32.mrb[0].mxu0
        %v489 = vadd.f32 %v408, %v488
        %490 = vdwg.mxu0
        %v491 = vmax.f32 %v487, 0.0
        %v492 = vmax.f32 %v489, 0.0
        %v493 = vld [vmem:[%s3] sm:$0xff]
        %495 = vset.pattern.permute.xlu0 0
        %496 = vperm.xlu0 %495, %v493
        %v497 = vpop.permute.xlu0 %496
        %v499 = vmul.f32 %v491, %v497
        %v500 = vmul.f32 %v492, %v497
        %v501 = vrot.slane %v499, 4
        %v502 = vadd.f32 %v499, %v501
        %v503 = vrot.slane %v502, 2
        %v504 = vadd.f32 %v502, %v503
        %v505 = vrot.slane %v504, 1
        %v506 = vadd.f32 %v504, %v505
        %v507 = vrot.slane %v500, 4
        %v508 = vadd.f32 %v500, %v507
        %v509 = vrot.slane %v508, 2
        %v510 = vadd.f32 %v508, %v509
        %v511 = vrot.slane %v510, 1
        %v512 = vadd.f32 %v510, %v511
        %s513 = sld [smem:[#allocation2]]
        %v514 = vstv %s513
        %v515 = vadd.f32 %v506, %v514
        %v516 = vadd.f32 %v512, %v514
        %v519 = vcombine.low %v515, %v516
        %v521 = vunpack.c.l.s4 1966171168
        %v522 = vunpack.c.0.s8 %v521
        %v523 = vlaneseq
        %v524 = vshrl.u32 %v523, 7
        %v525 = vsub.s32 %v522, %v524
        %v526 = vrot.slane %v519, %v525
        %v528 = vunpack.c.l.s4 1966171168
        %v529 = vunpack.c.0.s8 %v528
        %v530 = vlaneseq
        %v531 = vshrl.u32 %v530, 7
        %v532 = vsub.s32 %v529, %v531
        %v533 = vrot.slane %v526, %v532
        %v535 = vlaneseq
        %vm536 = vcmp.ge.s32.totalorder %v535, 0
        %vm537 = vcmp.lt.s32.totalorder %v535, 256
        %vm538 = vmand %vm536, %vm537
        %539 = vst.msk [vmem:[%s218] sm:$0x3] %vm538, %v533
        %s540 = sand.u32 %s138, 1
        %s541 = scalar_lea.sflag [#allocation4], %s540
        %s542 = sand.u32 %s138, 1
        %s543 = smul.addr %s542, 2
        %s544 = scalar_lea.vmem [#allocation3], %s543
        // Predicated region
        $region41: #{tpu_custom_call.1} parent=39 // pred_check
          %p545 = pneg %p148
        $region42: #{tpu_custom_call.1} parent=39 // pred_check_branch
          %547 = sbr.rel (%p545) target = $region44
        $region43: #{tpu_custom_call.1} parent=39 // pred_region
          %s549 = ssub.s32 32, 32
          %550 = vsyncadd %s541, %s549
          %s551 = smul.addr %s20, 2
          %s552 = smul.addr %s551, 16
          %s553 = scalar_lea.hbm %s5, %s552
          %s555 = sshll.u32 %s544, 4
          %s556 = int_to_ptr.vmem [resolvable:$true] %s555
          %558 = dma.vmem_to_hbm [thread:$0]  %s556, 32, %s553, %s541
        $region44: #{tpu_custom_call.1} parent=39 // pred_fallthru
          _
      $region40: #{tpu_custom_call.1} parent=5 // pred_fallthru
        _
      %p559 = scmp.le.s32.totalorder 2, %s15
      // Predicated region
      $region45: #{tpu_custom_call.1} parent=5 // pred_check
        %p560 = pneg %p559
      $region46: #{tpu_custom_call.1} parent=5 // pred_check_branch
        %562 = sbr.rel (%p560) target = $region48
      $region47: #{tpu_custom_call.1} parent=5 // pred_region
        %s563 = ssub.s32 %s15, 2
        // Predicated region
        $region49: #{tpu_custom_call.1} parent=47 // pred_check
          %p564 = pneg %p154
        $region50: #{tpu_custom_call.1} parent=47 // pred_check_branch
          %566 = sbr.rel (%p564) target = $region52
        $region51: #{tpu_custom_call.1} parent=47 // pred_region
          %s567 = sand.u32 %s139, 1
          %s568 = scalar_lea.sflag [#allocation4], %s567
          %s569 = sand.u32 %s139, 1
          %s570 = smul.addr %s569, 2
          %s571 = scalar_lea.vmem [#allocation3], %s570
          %572 = dma.done %s568, 32
        $region52: #{tpu_custom_call.1} parent=47 // pred_fallthru
          _
      $region48: #{tpu_custom_call.1} parent=5 // pred_fallthru
        _
    $region6: #{tpu_custom_call.1} parent=1 // loop_footer
      %s19 = sadd.s32 1, %s15
    $region7: #{tpu_custom_call.1} parent=1 // loop_footer_branch
      %14 = sbr.rel target = $region3
    $region8: #{tpu_custom_call.1} parent=1 // loop_exit
      _
    %573 = vsyncpa [#allocation4], 1
    %s574 = scalar_lea.sflag [#allocation4], 1
    %575 = vsyncpa %s574, 1

</llo_original>
